<compile_context>
chip_gen: v6e
topology: v6e:2x2x1
jax: 0.10.0
libtpu: 0.0.40
codegen_flags: <defaults>
</compile_context>

<pallas_src>
import functools
import math

import jax
import jax.numpy as jnp
from jax import lax
from jax.experimental import pallas as pl
from jax.experimental.pallas import tpu as pltpu


def _round_up(a: int, b: int) -> int:
    return (a + b - 1) // b * b


def _rowsum_resident_kernel(xr_ref, xc_ref, rowsum_ref):
    """Row-block vs. full resident column operand.

    xr_ref:     (row_tile, D_pad) rows (pre-normalized / 1/sqrt(tau)-scaled)
    xc_ref:     (padded, D_pad)   full column operand, resident in VMEM
    rowsum_ref: (row_tile, 1)     sum_k exp(sim[r, k]) output
    """
    # Contract the last (lane) dims of both operands -> no transposed copy.
    s = lax.dot_general(
        xr_ref[...], xc_ref[...],
        dimension_numbers=(((1,), (1,)), ((), ())),
        preferred_element_type=jnp.float32)
    rowsum_ref[...] = jnp.sum(jnp.exp(s), axis=-1, keepdims=True)


def _rowsum_streaming_kernel(xr_ref, xc_ref, rowsum_ref, acc_ref, *,
                             lane_groups):
    """Fallback (row_block, col_block) grid step for large 2N*D.

    acc_ref: (row_tile, 128) VMEM scratch; exp(s) lane groups are accumulated
    with VALU adds each step, single XLU cross-lane reduce at finalize.
    """
    j = pl.program_id(1)

    @pl.when(j == 0)
    def _init():
        acc_ref[...] = jnp.zeros_like(acc_ref)

    s = lax.dot_general(
        xr_ref[...], xc_ref[...],
        dimension_numbers=(((1,), (1,)), ((), ())),
        preferred_element_type=jnp.float32)
    e = jnp.exp(s)

    acc = acc_ref[...]
    for g in range(lane_groups):                       # static, lane-aligned
        acc = acc + e[:, g * 128:(g + 1) * 128]
    acc_ref[...] = acc

    @pl.when(j == pl.num_programs(1) - 1)
    def _finalize():
        rowsum_ref[...] = jnp.sum(acc_ref[...], axis=-1, keepdims=True)


def contrastive_loss(xi, xj, *, tau=1.0, normalize=False, row_tile=128,
                     col_tile=256, matmul_dtype=None,
                     max_resident_bytes=40 * 2**20):
    """Pallas implementation of ContrastiveLoss.forward (returns scalar loss)."""
    assert xi.shape == xj.shape and xi.ndim == 2
    n, dim = xi.shape
    two_n = 2 * n
    f32 = jnp.float32

    # ---- Wrapper preprocessing (single materialized pad at the end) --------
    x = jnp.concatenate([xi, xj], axis=0).astype(f32)            # (2N, D)
    if normalize:
        # Pre-normalize rows once: the matmul then yields cosine similarity
        # directly (no K=1 norm outer product, no (2N,2N) divide).
        x = x * lax.rsqrt(jnp.maximum(jnp.sum(x * x, -1, keepdims=True), 1e-32))
    # Fold 1/tau into both operands: (x/sqrt(tau)).(x/sqrt(tau)) == (x.x)/tau.
    x = x * f32(1.0 / math.sqrt(float(tau)))

    # Positive-pair logit hoisted out of the kernel (partner input removed);
    # 1/tau and the normalization are already folded into x.
    pos_half = jnp.sum(x[:n] * x[n:], axis=-1)                   # (N,)  f32
    pos = jnp.concatenate([pos_half, pos_half], axis=0)          # (2N,) f32

    if matmul_dtype is None:
        matmul_dtype = (jnp.bfloat16
                        if xi.dtype == jnp.bfloat16 and xj.dtype == jnp.bfloat16
                        else jnp.float32)
    mm_dtype = jnp.dtype(matmul_dtype)
    in_bytes = mm_dtype.itemsize

    d_pad = _round_up(dim, 128)                    # lane-aligned feature dim
    row_tile = _round_up(max(8, min(int(row_tile), _round_up(two_n, 8))), 8)

    # ---- Choose resident-column fast path vs. streaming fallback ----------
    padded_res = _round_up(two_n, row_tile)
    est_res = (2 * row_tile * d_pad * in_bytes        # xr double-buffer
               + 2 * padded_res * d_pad * in_bytes    # resident column operand
               + 2 * row_tile * 4                     # output blocks
               + 2 * row_tile * padded_res * 4)       # s / exp(s) live values
    use_resident = est_res <= int(max_resident_bytes)

    if use_resident:
        padded = padded_res
        grid = (padded // row_tile,)
        kernel = _rowsum_resident_kernel
        in_specs = [
            pl.BlockSpec((row_tile, d_pad), lambda i: (i, 0)),   # row block
            pl.BlockSpec((padded, d_pad), lambda i: (0, 0)),     # resident cols
        ]
        out_specs = pl.BlockSpec((row_tile, 1), lambda i: (i, 0))
        scratch_shapes = []
        dim_sem = ("parallel",)
        vmem_limit = int(min(48 << 20, max(est_res + (8 << 20), 16 << 20)))
    else:
        col_tile = _round_up(max(128, min(int(col_tile),
                                          _round_up(two_n, 128))), 128)
        padded = _round_up(two_n, math.lcm(row_tile, col_tile))
        grid = (padded // row_tile, padded // col_tile)
        lane_groups = col_tile // 128
        kernel = functools.partial(_rowsum_streaming_kernel,
                                   lane_groups=lane_groups)
        # Deeper pipelining on the only per-step-changing input when D is
        # small (short per-step compute would otherwise expose DMA latency).
        xc_spec = pl.BlockSpec((col_tile, d_pad), lambda i, j: (j, 0))
        if d_pad <= 256:
            try:
                xc_spec = pl.BlockSpec((col_tile, d_pad), lambda i, j: (j, 0),
                                       pipeline_mode=pl.Buffered(3))
            except (TypeError, AttributeError):
                pass
        in_specs = [
            pl.BlockSpec((row_tile, d_pad), lambda i, j: (i, 0)),
            xc_spec,
        ]
        out_specs = pl.BlockSpec((row_tile, 1), lambda i, j: (i, 0))
        scratch_shapes = [pltpu.VMEM((row_tile, 128), f32)]
        dim_sem = ("parallel", "arbitrary")
        est_str = (2 * row_tile * d_pad * in_bytes
                   + 3 * col_tile * d_pad * in_bytes
                   + 2 * row_tile * 4
                   + row_tile * 128 * 4
                   + 2 * row_tile * col_tile * 4)
        vmem_limit = int(min(48 << 20, max(est_str + (8 << 20), 16 << 20)))

    num_pad_rows = padded - two_n
    x_mm = x.astype(mm_dtype)
    if num_pad_rows or d_pad != dim:
        x_mm = jnp.pad(x_mm, ((0, num_pad_rows), (0, d_pad - dim)))

    rowsum = pl.pallas_call(
        kernel,
        out_shape=jax.ShapeDtypeStruct((padded, 1), f32),
        grid_spec=pltpu.PrefetchScalarGridSpec(
            num_scalar_prefetch=0,
            grid=grid,
            in_specs=in_specs,
            out_specs=out_specs,
            scratch_shapes=scratch_shapes),
        compiler_params=pltpu.CompilerParams(
            dimension_semantics=dim_sem,
            vmem_limit_bytes=vmem_limit),
    )(x_mm, x_mm)

    a = rowsum[:two_n, 0]
    # Each zero-padded column contributes exp(0)=1 per row; subtract that
    # together with the reference's norm_sum = exp(1/tau).
    b = a - f32(num_pad_rows) - f32(math.exp(1.0 / float(tau)))
    # -log(sim_match / b) == log(b) - pos  (identical math, fewer EUP ops).
    # TODO(synk): like the PyTorch reference, b can be <= 0 when
    # normalize=False and rows are not unit-norm -> NaN/Inf in the loss.
    return jnp.mean(jnp.log(b) - pos)


def _contrastive_loss_ref(xi, xj, *, tau=1.0, normalize=False):
    """Pure-JAX reference mirroring the PyTorch module literally."""
    xi = xi.astype(jnp.float32)
    xj = xj.astype(jnp.float32)
    x = jnp.concatenate([xi, xj], axis=0)
    sim_mat = x @ x.T
    if normalize:
        nrm = jnp.linalg.norm(x, axis=1, keepdims=True)
        sim_mat = sim_mat / jnp.maximum(nrm @ nrm.T, 1e-16)
    sim_mat2 = jnp.exp(sim_mat / tau)
    if normalize:
        denom = jnp.linalg.norm(xi, axis=1) * jnp.linalg.norm(xj, axis=1)
        sim_match = jnp.exp(jnp.sum(xi * xj, axis=-1) / denom / tau)
    else:
        sim_match = jnp.exp(jnp.sum(xi * xj, axis=-1) / tau)
    sim_match = jnp.concatenate([sim_match, sim_match], axis=0)
    norm_sum = jnp.exp(jnp.ones(x.shape[0], jnp.float32) / tau)
    a = jnp.sum(sim_mat2, axis=-1)
    return jnp.mean(-jnp.log(sim_match / (a - norm_sum)))


if __name__ == "__main__":
    key = jax.random.PRNGKey(0)
    k1, k2 = jax.random.split(key)
    ok = True

    # Small deterministic case: N=8, D=32 (single row block, resident path).
    N, D = 8, 32
    xi = jax.random.normal(k1, (N, D), dtype=jnp.float32) * 0.1
    xj = jax.random.normal(k2, (N, D), dtype=jnp.float32) * 0.1
    for tau, normalize in ((1.0, False), (0.5, True)):
        loss = contrastive_loss(xi, xj, tau=tau, normalize=normalize)
        jax.block_until_ready(loss)
        ref = _contrastive_loss_ref(xi, xj, tau=tau, normalize=normalize)
        if not jnp.allclose(loss, ref, rtol=1e-5, atol=1e-5):
            ok = False
            print("MISMATCH small", tau, normalize, loss, ref)

    # Larger case: 2N=272, D=160 (D pads to 256, rows pad to tile multiple).
    k3, k4 = jax.random.split(k2)
    N2, D2 = 136, 160
    xi2 = jax.random.normal(k3, (N2, D2), dtype=jnp.float32) * 0.05
    xj2 = jax.random.normal(k4, (N2, D2), dtype=jnp.float32) * 0.05
    ref2 = _contrastive_loss_ref(xi2, xj2, tau=1.0, normalize=True)

    # (a) resident-column fast path.
    loss2 = contrastive_loss(xi2, xj2, tau=1.0, normalize=True)
    jax.block_until_ready(loss2)
    if not jnp.allclose(loss2, ref2, rtol=1e-5, atol=1e-5):
        ok = False
        print("MISMATCH resident", loss2, ref2)

    # (b) force the streaming fallback (row x col grid, VALU lane-group acc).
    loss3 = contrastive_loss(xi2, xj2, tau=1.0, normalize=True,
                             max_resident_bytes=0)
    jax.block_until_ready(loss3)
    if not jnp.allclose(loss3, ref2, rtol=1e-5, atol=1e-5):
        ok = False
        print("MISMATCH streaming", loss3, ref2)

    # (c) bf16 MXU operands with f32 accumulation (looser tolerance).
    loss4 = contrastive_loss(xi2, xj2, tau=1.0, normalize=False,
                             matmul_dtype=jnp.bfloat16)
    jax.block_until_ready(loss4)
    ref4 = _contrastive_loss_ref(xi2, xj2, tau=1.0, normalize=False)
    if not jnp.allclose(loss4, ref4, rtol=5e-3, atol=5e-3):
        ok = False
        print("MISMATCH bf16", loss4, ref4)

    if ok:
        print("KERNEL_OK")
</pallas_src>

<mosaic_0001>
module attributes {stable_mosaic.version = 11 : i64} {
  func.func @_rowsum_resident_kernel(%arg0: i32, %arg1: memref<16x128xf32, #tpu.memory_space<vmem>>, %arg2: memref<16x128xf32, #tpu.memory_space<vmem>>, %arg3: memref<16x1xf32, #tpu.memory_space<vmem>>) attributes {dimension_semantics = [#tpu.dimension_semantics<parallel>], iteration_bounds = array<i64: 1>, scalar_prefetch = 0 : i64, scratch_operands = 0 : i64, tpu.core_type = #tpu.core_type<tc>, window_params = [{transform_indices = @transform_0, window_bounds = array<i64: 16, 128>}, {pipeline_mode = #tpu.pipeline_mode<synchronous>, transform_indices = @transform_1, window_bounds = array<i64: 16, 128>}, {transform_indices = @transform_2, window_bounds = array<i64: 16, 1>}]} {
    %c0 = arith.constant 0 : index
    %c0_0 = arith.constant 0 : index
    %0 = vector.load %arg1[%c0, %c0_0] : memref<16x128xf32, #tpu.memory_space<vmem>>, vector<16x128xf32>
    %c0_1 = arith.constant 0 : index
    %c0_2 = arith.constant 0 : index
    %1 = vector.load %arg2[%c0_1, %c0_2] : memref<16x128xf32, #tpu.memory_space<vmem>>, vector<16x128xf32>
    %cst = arith.constant dense<0.000000e+00> : vector<16x16xf32>
    %2 = tpu.matmul %0, %1, %cst {dimension_numbers = #tpu.dot_dimension_numbers<[1], [1], [0], [0], [0, 0, 1, 0], [], []>} : vector<16x128xf32>, vector<16x128xf32>, vector<16x16xf32> -> vector<16x16xf32>
    %3 = math.exp %2 : vector<16x16xf32>
    %cst_3 = arith.constant dense<0.000000e+00> : vector<16xf32>
    %4 = vector.multi_reduction <add>, %3, %cst_3 [1] : vector<16x16xf32> to vector<16xf32>
    %5 = vector.shape_cast %4 : vector<16xf32> to vector<16x1xf32>
    %c0_4 = arith.constant 0 : index
    %c0_5 = arith.constant 0 : index
    %6 = vector.load %arg3[%c0_4, %c0_5] : memref<16x1xf32, #tpu.memory_space<vmem>>, vector<16x1xf32>
    tpu.vector_store %arg3[%c0_4, %c0_5], %5 {strides = array<i32>} : memref<16x1xf32, #tpu.memory_space<vmem>>, vector<16x1xf32>,
    return
  }
  func.func @transform_0(%arg0: i32) -> (i32, i32) {
    %c0_i32 = arith.constant 0 : i32
    %c0_i32_0 = arith.constant 0 : i32
    return %arg0, %c0_i32 : i32, i32
  }
  func.func @transform_1(%arg0: i32) -> (i32, i32) {
    %c0_i32 = arith.constant 0 : i32
    %c0_i32_0 = arith.constant 0 : i32
    %c0_i32_1 = arith.constant 0 : i32
    return %c0_i32, %c0_i32_0 : i32, i32
  }
  func.func @transform_2(%arg0: i32) -> (i32, i32) {
    %c0_i32 = arith.constant 0 : i32
    %c0_i32_0 = arith.constant 0 : i32
    return %arg0, %c0_i32 : i32, i32
  }
}

</mosaic_0001>

<llo_original>
// kernel: tpu_custom_call.1
$region0: #{tpu_custom_call.1}
  #allocation0 [shape = 'u32[]', space=smem, size = 0x4, offset = 0x4, fixed_abs, tag = 'smem constant byte address 0x4 - core index']
  #allocation1 [shape = 'u32[144,128]{1,0:T(1,128)}', space=vmem, size = 0x12000, scoped, tag = 'internal scratch']
  %s0 = inlined_call_operand.hbm [shape: f32[16,128], index: 0, kind: input, shape index: {}]
  %s1 = inlined_call_operand.hbm [shape: f32[16,128], index: 1, kind: input, shape index: {}]
  %s2 = inlined_call_operand.vmem [shape: f32[16,1], index: 2, kind: output, shape index: {}]
  %s3 = sld [smem:[#allocation0]]
  $region26: #{tpu_custom_call.1} parent=0
    _
  %s5 = ssub.s32 1, %s3
  %s6 = scalar_select 0, %s5, %s3
  $region1: #{tpu_custom_call.1} parent=0
    #allocation2 [shape = 'u8[8192]{0}', space=vmem, size = 0x2000, scoped, tag = 'input window, operand 0, single buffered']
    #allocation3 [shape = 's32[1]{0}', space=sflag, size = 0x4, scoped, tag = 'scoped memory for tpu_custom_call.1']
    #allocation4 [shape = 'u8[8192]{0}', space=vmem, size = 0x2000, scoped, tag = 'input window, operand 1, single buffered']
    #allocation5 [shape = 's32[1]{0}', space=sflag, size = 0x4, scoped, tag = 'scoped memory for tpu_custom_call.1']
    %7 = vsyncpa [#allocation3], 0
    %8 = vsyncpa [#allocation5], 0
    // Predicated region
    $region2: #{tpu_custom_call.1} parent=1 // pred_check
      _
    $region3: #{tpu_custom_call.1} parent=1 // pred_check_branch
      %10 = sbr.rel (0) target = $region5
    $region4: #{tpu_custom_call.1} parent=1 // pred_region
      %s12 = ssub.s32 256, 256
      %13 = vsyncadd [#allocation3], %s12
      %s14 = sshll.u32 [#allocation2], 4
      %s15 = int_to_ptr.vmem [resolvable:$true] %s14
      %20 = dma.hbm_to_vmem [thread:$0]  %s0, 256, %s15, [#allocation3], 128, 128, 8
    $region5: #{tpu_custom_call.1} parent=1 // pred_fallthru
      _
    // Predicated region
    $region6: #{tpu_custom_call.1} parent=1 // pred_check
      _
    $region7: #{tpu_custom_call.1} parent=1 // pred_check_branch
      %22 = sbr.rel (0) target = $region9
    $region8: #{tpu_custom_call.1} parent=1 // pred_region
      %s24 = ssub.s32 256, 256
      %25 = vsyncadd [#allocation5], %s24
      %s26 = sshll.u32 [#allocation4], 4
      %s27 = int_to_ptr.vmem [resolvable:$true] %s26
      %32 = dma.hbm_to_vmem [thread:$0]  %s1, 256, %s27, [#allocation5], 128, 128, 8
    $region9: #{tpu_custom_call.1} parent=1 // pred_fallthru
      _
    // Predicated region
    $region10: #{tpu_custom_call.1} parent=1 // pred_check
      _
    $region11: #{tpu_custom_call.1} parent=1 // pred_check_branch
      %34 = sbr.rel (0) target = $region13
    $region12: #{tpu_custom_call.1} parent=1 // pred_region
      %35 = dma.done [#allocation3], 256
    $region13: #{tpu_custom_call.1} parent=1 // pred_fallthru
      _
    // Predicated region
    $region14: #{tpu_custom_call.1} parent=1 // pred_check
      _
    $region15: #{tpu_custom_call.1} parent=1 // pred_check_branch
      %37 = sbr.rel (0) target = $region17
    $region16: #{tpu_custom_call.1} parent=1 // pred_region
      %38 = dma.done [#allocation5], 256
    $region17: #{tpu_custom_call.1} parent=1 // pred_fallthru
      _
    %v39 = vld [vmem:[#allocation2] sm:$0xff]
    %v40 = vld [vmem:[#allocation2 + $0x8] sm:$0xff]
    %v41 = vld [vmem:[#allocation4] sm:$0xff]
    %v42 = vld [vmem:[#allocation4 + $0x8] sm:$0xff]
    %43 = vmatprep.subr.mxu0 0.0
    %44 = vmatpush1.xpose.msra.mxu0 0.0
    %45 = vmatprep.subr.mxu0 0.0
    %46 = vmatpush1.xpose.msra.mxu0 0.0
    %47 = vmatprep.subr.mxu0 0.0
    %48 = vmatpush1.xpose.msra.mxu0 0.0
    %49 = vmatprep.subr.mxu0 0.0
    %50 = vmatpush1.xpose.msra.mxu0 0.0
    %51 = vmatprep.subr.mxu0 0.0
    %52 = vmatpush1.xpose.msra.mxu0 0.0
    %53 = vmatprep.subr.mxu0 0.0
    %54 = vmatpush1.xpose.msra.mxu0 0.0
    %55 = vmatprep.subr.mxu0 0.0
    %56 = vmatpush1.xpose.msra.mxu0 0.0
    %57 = vmatprep.subr.mxu0 0.0
    %58 = vmatpush1.xpose.msra.mxu0 0.0
    %59 = vmatprep.subr.mxu0 0.0
    %60 = vmatpush1.xpose.msra.mxu0 0.0
    %61 = vmatprep.subr.mxu0 0.0
    %62 = vmatpush1.xpose.msra.mxu0 0.0
    %63 = vmatprep.subr.mxu0 0.0
    %64 = vmatpush1.xpose.msra.mxu0 0.0
    %65 = vmatprep.subr.mxu0 0.0
    %66 = vmatpush1.xpose.msra.mxu0 0.0
    %67 = vmatprep.subr.mxu0 0.0
    %68 = vmatpush1.xpose.msra.mxu0 0.0
    %69 = vmatprep.subr.mxu0 0.0
    %70 = vmatpush1.xpose.msra.mxu0 0.0
    %71 = vmatprep.subr.mxu0 0.0
    %72 = vmatpush1.xpose.msra.mxu0 %v42
    %73 = vmatprep.subr.mxu0 0.0
    %74 = vmatpush1.xpose.msra.mxu0 %v41
    %75 = vmatprep.subr.mxu0 0.0
    %76 = vmatpush2.xpose.msra.mxu0 0.0
    %77 = vmatprep.subr.mxu0 0.0
    %78 = vmatpush2.xpose.msra.mxu0 0.0
    %79 = vmatprep.subr.mxu0 0.0
    %80 = vmatpush2.xpose.msra.mxu0 0.0
    %81 = vmatprep.subr.mxu0 0.0
    %82 = vmatpush2.xpose.msra.mxu0 0.0
    %83 = vmatprep.subr.mxu0 0.0
    %84 = vmatpush2.xpose.msra.mxu0 0.0
    %85 = vmatprep.subr.mxu0 0.0
    %86 = vmatpush2.xpose.msra.mxu0 0.0
    %87 = vmatprep.subr.mxu0 0.0
    %88 = vmatpush2.xpose.msra.mxu0 0.0
    %89 = vmatprep.subr.mxu0 0.0
    %90 = vmatpush2.xpose.msra.mxu0 0.0
    %91 = vmatprep.subr.mxu0 0.0
    %92 = vmatpush2.xpose.msra.mxu0 0.0
    %93 = vmatprep.subr.mxu0 0.0
    %94 = vmatpush2.xpose.msra.mxu0 0.0
    %95 = vmatprep.subr.mxu0 0.0
    %96 = vmatpush2.xpose.msra.mxu0 0.0
    %97 = vmatprep.subr.mxu0 0.0
    %98 = vmatpush2.xpose.msra.mxu0 0.0
    %99 = vmatprep.subr.mxu0 0.0
    %100 = vmatpush2.xpose.msra.mxu0 0.0
    %101 = vmatprep.subr.mxu0 0.0
    %102 = vmatpush2.xpose.msra.mxu0 0.0
    %103 = vmatprep.subr.mxu0 0.0
    %104 = vmatpush2.xpose.msra.mxu0 0.0
    %105 = vmatprep.subr.mxu0 0.0
    %106 = vmatpush2.xpose.msra.mxu0 0.0
    %107 = vmatprep.mubr.f32.mxu0 0.0
    %108 = vmatmul.mubr.f32.gmra.mxu0 %v39
    %v109 = vpop.f32.mrf.mxu0
    %v110 = vadd.f32 0.0, %v109
    %v111 = vpop.f32.mrf.mxu0
    %112 = vmatprep.mubr.f32.mxu0 0.0
    %113 = vmatmul.mubr.f32.gmra.mxu0 %v40
    %v114 = vpop.f32.mrf.mxu0
    %v115 = vadd.f32 0.0, %v114
    %v116 = vpop.f32.mrf.mxu0
    %117 = vdwg.mxu0
    %v118 = vmul.f32 %v110, 1.442695
    %v119 = vpow.pop %v118
    %v120 = vmul.f32 %v115, 1.442695
    %v121 = vpow.pop %v120
    %vm122 = vcmask 130048
    %v123 = vsel %vm122, %v119, 0.0
    %124 = vadd.xlane.f32.xlu0 %v123
    %v125 = vpop.xlane.xlu0 %124
    %v126 = vsel %vm122, %v121, 0.0
    %127 = vadd.xlane.f32.xlu0 %v126
    %v128 = vpop.xlane.xlu0 %127
    %vm129 = vcmask 7168
    %130 = vst.msk [vmem:[%s2] sm:$0xff] %vm129, %v125
    %131 = vst.msk [vmem:[%s2 + $0x8] sm:$0xff] %vm129, %v128
    // Predicated region
    $region18: #{tpu_custom_call.1} parent=1 // pred_check
      _
    $region19: #{tpu_custom_call.1} parent=1 // pred_check_branch
      %133 = sbr.rel (0) target = $region21
    $region20: #{tpu_custom_call.1} parent=1 // pred_region
      _
    $region21: #{tpu_custom_call.1} parent=1 // pred_fallthru
      _
    // Predicated region
    $region22: #{tpu_custom_call.1} parent=1 // pred_check
      _
    $region23: #{tpu_custom_call.1} parent=1 // pred_check_branch
      %135 = sbr.rel (0) target = $region25
    $region24: #{tpu_custom_call.1} parent=1 // pred_region
      _
    $region25: #{tpu_custom_call.1} parent=1 // pred_fallthru
      _
    %136 = vsyncpa [#allocation3], 1
    %137 = vsyncpa [#allocation5], 1

</llo_original>
